<compile_context>
chip_gen: v7x
topology: tpu7x:2x2x1
jax: 0.10.0
libtpu: 0.0.40
codegen_flags: <defaults>
</compile_context>

<pallas_src>
import functools
import math

import jax
import jax.numpy as jnp
from jax.experimental import pallas as pl
from jax.experimental.pallas import tpu as pltpu

_LANE = 128          # TPU lane width; fused head output is padded to this.
_NEG_SLOPE = 0.01    # leaky_relu negative slope (matches the PyTorch module)


def _round_up(x: int, m: int) -> int:
    return (x + m - 1) // m * m


def _actor_kernel(x_ref, w1_ref, b1_ref, w2_ref, b2_ref, wh_ref, bh_ref,
                  out_ref, *, action_dim: int):
    """One batch tile of the fused Actor forward pass."""
    x = x_ref[...]

    # Layer 1: Linear(obs_dim, 128) + leaky_relu
    h = jnp.dot(x, w1_ref[...], preferred_element_type=jnp.float32) + b1_ref[...]
    h = jnp.where(h > 0, h, _NEG_SLOPE * h)

    # Layer 2: Linear(128, 64) + leaky_relu
    h = jnp.dot(h, w2_ref[...], preferred_element_type=jnp.float32) + b2_ref[...]
    h = jnp.where(h > 0, h, _NEG_SLOPE * h)

    # Fused heads: one (64, 128-padded) matmul.  Lanes [0, action_dim) are the
    # raw action head; lanes [action_dim, ...) get tanh (padding lanes are
    # zero-weighted so tanh(0)=0 there; they are sliced off in the wrapper).
    heads = jnp.dot(h, wh_ref[...], preferred_element_type=jnp.float32) + bh_ref[...]
    lane = jax.lax.broadcasted_iota(jnp.int32, heads.shape, dimension=1)
    out = jnp.where(lane < action_dim, heads, jnp.tanh(heads))
    out_ref[...] = out.astype(out_ref.dtype)


@functools.partial(jax.jit, static_argnames=("batch_tile",))
def actor_forward(state, params, *, batch_tile: int = 512):
    """Fused Actor forward pass on TPU via a single batch-gridded Pallas kernel.

    batch_tile: rows per grid step.  512 is a good default for v6e/v7x
    (multiple of 256 fills the MXU M dimension); 128-256 works well on v5e.
    """
    w1, b1, w2, b2, wa, ba, wp, bp = params
    B, obs_dim = state.shape
    hidden1 = w1.shape[1]
    hidden2 = w2.shape[1]
    action_dim = wa.shape[1]
    action_parameters_dim = wp.shape[1]

    # --- fuse + lane-pad the two heads into one (hidden2, head_w) weight ----
    n_heads = action_dim + action_parameters_dim
    head_w = _round_up(n_heads, _LANE)
    pad = head_w - n_heads
    wh = jnp.concatenate(
        [wa, wp, jnp.zeros((hidden2, pad), dtype=wa.dtype)], axis=1)
    bh = jnp.concatenate(
        [ba, bp, jnp.zeros((1, pad), dtype=ba.dtype)], axis=1)

    # --- batch tile: multiple of 8 sublanes, capped at batch_tile ------------
    tb = min(batch_tile, _round_up(B, 8))
    tb = max(8, _round_up(tb, 8))
    grid = (pl.cdiv(B, tb),)

    def resident(shape):
        # Weights/biases: same block every grid step -> stay VMEM-resident.
        return pl.BlockSpec(shape, lambda i: (0, 0))

    out = pl.pallas_call(
        functools.partial(_actor_kernel, action_dim=action_dim),
        out_shape=jax.ShapeDtypeStruct((B, head_w), jnp.float32),
        grid=grid,
        in_specs=[
            pl.BlockSpec((tb, obs_dim), lambda i: (i, 0)),   # state, tiled on batch
            resident((obs_dim, hidden1)),                    # W1
            resident((1, hidden1)),                          # b1
            resident((hidden1, hidden2)),                    # W2
            resident((1, hidden2)),                          # b2
            resident((hidden2, head_w)),                     # fused head weight
            resident((1, head_w)),                           # fused head bias
        ],
        out_specs=pl.BlockSpec((tb, head_w), lambda i: (i, 0)),
        compiler_params=pltpu.CompilerParams(
            dimension_semantics=("parallel",)),              # megacore on v7x
    )(state, w1, b1, w2, b2, wh, bh)

    action = out[:, :action_dim]
    action_params = out[:, action_dim:n_heads]
    return action, action_params


def init_actor_params(key, obs_dim, action_dim, action_parameters_dim):
    """Deterministic parameter init mirroring the PyTorch module's __init__.

    - hidden layers: kaiming_normal_(nonlinearity='leaky_relu') -> normal with
      std = gain / sqrt(fan_in), gain = sqrt(2 / (1 + 0.01**2)); bias = 0
    - output heads: normal(std=0.01); bias = 0
    Weights are returned as (in_features, out_features) = W^T for x @ W.
    """
    k1, k2, k3, k4 = jax.random.split(key, 4)
    gain = math.sqrt(2.0 / (1.0 + 0.01 ** 2))

    def kaiming(k, fan_in, fan_out):
        std = gain / math.sqrt(fan_in)
        return std * jax.random.normal(k, (fan_in, fan_out), dtype=jnp.float32)

    w1 = kaiming(k1, obs_dim, 128)
    b1 = jnp.zeros((1, 128), dtype=jnp.float32)
    w2 = kaiming(k2, 128, 64)
    b2 = jnp.zeros((1, 64), dtype=jnp.float32)

    wa = 0.01 * jax.random.normal(k3, (64, action_dim), dtype=jnp.float32)
    ba = jnp.zeros((1, action_dim), dtype=jnp.float32)
    wp = 0.01 * jax.random.normal(k4, (64, action_parameters_dim), dtype=jnp.float32)
    bp = jnp.zeros((1, action_parameters_dim), dtype=jnp.float32)

    return (w1, b1, w2, b2, wa, ba, wp, bp)


def actor_forward_ref(state, params):
    """Pure-JAX reference for correctness checking (matches PyTorch forward)."""
    w1, b1, w2, b2, wa, ba, wp, bp = params
    h = state @ w1 + b1
    h = jnp.where(h > 0, h, _NEG_SLOPE * h)
    h = h @ w2 + b2
    h = jnp.where(h > 0, h, _NEG_SLOPE * h)
    action = h @ wa + ba
    action_params = jnp.tanh(h @ wp + bp)
    return action, action_params


if __name__ == "__main__":
    obs_dim = 32
    action_dim = 4
    action_parameters_dim = 6
    batch = 8

    key = jax.random.PRNGKey(0)
    k_params, k_state, k_state2 = jax.random.split(key, 3)

    params = init_actor_params(k_params, obs_dim, action_dim, action_parameters_dim)

    # --- small-batch check (single grid step) --------------------------------
    state = jax.random.normal(k_state, (batch, obs_dim), dtype=jnp.float32)
    action, action_params = actor_forward(state, params)
    jax.block_until_ready((action, action_params))

    action_r, params_r = actor_forward_ref(state, params)
    assert action.shape == (batch, action_dim)
    assert action_params.shape == (batch, action_parameters_dim)
    assert jnp.allclose(action, action_r, atol=1e-5, rtol=1e-5)
    assert jnp.allclose(action_params, params_r, atol=1e-5, rtol=1e-5)

    # --- multi-step grid check (exercise the batch pipeline) -----------------
    big_batch = 64
    state2 = jax.random.normal(k_state2, (big_batch, obs_dim), dtype=jnp.float32)
    a2, p2 = actor_forward(state2, params, batch_tile=16)   # grid of 4 steps
    jax.block_until_ready((a2, p2))
    a2_r, p2_r = actor_forward_ref(state2, params)
    assert jnp.allclose(a2, a2_r, atol=1e-5, rtol=1e-5)
    assert jnp.allclose(p2, p2_r, atol=1e-5, rtol=1e-5)

    print("KERNEL_OK")
</pallas_src>

<mosaic_0001>
module attributes {stable_mosaic.version = 11 : i64} {
  func.func @_actor_kernel(%arg0: i32, %arg1: memref<8x32xf32, #tpu.memory_space<vmem>>, %arg2: memref<32x128xf32, #tpu.memory_space<vmem>>, %arg3: memref<1x128xf32, #tpu.memory_space<vmem>>, %arg4: memref<128x64xf32, #tpu.memory_space<vmem>>, %arg5: memref<1x64xf32, #tpu.memory_space<vmem>>, %arg6: memref<64x128xf32, #tpu.memory_space<vmem>>, %arg7: memref<1x128xf32, #tpu.memory_space<vmem>>, %arg8: memref<8x128xf32, #tpu.memory_space<vmem>>) attributes {dimension_semantics = [#tpu.dimension_semantics<parallel>], iteration_bounds = array<i64: 1>, scalar_prefetch = 0 : i64, scratch_operands = 0 : i64, tpu.core_type = #tpu.core_type<tc>, window_params = [{transform_indices = @transform_0, window_bounds = array<i64: 8, 32>}, {pipeline_mode = #tpu.pipeline_mode<synchronous>, transform_indices = @transform_1, window_bounds = array<i64: 32, 128>}, {pipeline_mode = #tpu.pipeline_mode<synchronous>, transform_indices = @transform_2, window_bounds = array<i64: 1, 128>}, {pipeline_mode = #tpu.pipeline_mode<synchronous>, transform_indices = @transform_3, window_bounds = array<i64: 128, 64>}, {pipeline_mode = #tpu.pipeline_mode<synchronous>, transform_indices = @transform_4, window_bounds = array<i64: 1, 64>}, {pipeline_mode = #tpu.pipeline_mode<synchronous>, transform_indices = @transform_5, window_bounds = array<i64: 64, 128>}, {pipeline_mode = #tpu.pipeline_mode<synchronous>, transform_indices = @transform_6, window_bounds = array<i64: 1, 128>}, {transform_indices = @transform_7, window_bounds = array<i64: 8, 128>}]} {
    %c0 = arith.constant 0 : index
    %c0_0 = arith.constant 0 : index
    %0 = vector.load %arg1[%c0, %c0_0] : memref<8x32xf32, #tpu.memory_space<vmem>>, vector<8x32xf32>
    %c0_1 = arith.constant 0 : index
    %c0_2 = arith.constant 0 : index
    %1 = vector.load %arg2[%c0_1, %c0_2] : memref<32x128xf32, #tpu.memory_space<vmem>>, vector<32x128xf32>
    %cst = arith.constant dense<0.000000e+00> : vector<8x128xf32>
    %2 = tpu.matmul %0, %1, %cst {dimension_numbers = #tpu.dot_dimension_numbers<[1], [0], [0], [1], [0, 0, 1, 1], [], []>} : vector<8x32xf32>, vector<32x128xf32>, vector<8x128xf32> -> vector<8x128xf32>
    %c0_3 = arith.constant 0 : index
    %c0_4 = arith.constant 0 : index
    %3 = vector.load %arg3[%c0_3, %c0_4] : memref<1x128xf32, #tpu.memory_space<vmem>>, vector<1x128xf32>
    %4 = vector.broadcast %3 : vector<1x128xf32> to vector<8x128xf32>
    %5 = arith.addf %2, %4 : vector<8x128xf32>
    %cst_5 = arith.constant 0.000000e+00 : f32
    %6 = vector.broadcast %cst_5 : f32 to vector<8x128xf32>
    %7 = arith.cmpf ogt, %5, %6 : vector<8x128xf32>
    %cst_6 = arith.constant 0.00999999977 : f32
    %8 = vector.broadcast %cst_6 : f32 to vector<8x128xf32>
    %9 = arith.mulf %8, %5 : vector<8x128xf32>
    %10 = arith.select %7, %5, %9 : vector<8x128xi1>, vector<8x128xf32>
    %c0_7 = arith.constant 0 : index
    %c0_8 = arith.constant 0 : index
    %11 = vector.load %arg4[%c0_7, %c0_8] : memref<128x64xf32, #tpu.memory_space<vmem>>, vector<128x64xf32>
    %cst_9 = arith.constant dense<0.000000e+00> : vector<8x64xf32>
    %12 = tpu.matmul %10, %11, %cst_9 {dimension_numbers = #tpu.dot_dimension_numbers<[1], [0], [0], [1], [0, 0, 1, 1], [], []>} : vector<8x128xf32>, vector<128x64xf32>, vector<8x64xf32> -> vector<8x64xf32>
    %c0_10 = arith.constant 0 : index
    %c0_11 = arith.constant 0 : index
    %13 = vector.load %arg5[%c0_10, %c0_11] : memref<1x64xf32, #tpu.memory_space<vmem>>, vector<1x64xf32>
    %14 = vector.broadcast %13 : vector<1x64xf32> to vector<8x64xf32>
    %15 = arith.addf %12, %14 : vector<8x64xf32>
    %cst_12 = arith.constant 0.000000e+00 : f32
    %16 = vector.broadcast %cst_12 : f32 to vector<8x64xf32>
    %17 = arith.cmpf ogt, %15, %16 : vector<8x64xf32>
    %cst_13 = arith.constant 0.00999999977 : f32
    %18 = vector.broadcast %cst_13 : f32 to vector<8x64xf32>
    %19 = arith.mulf %18, %15 : vector<8x64xf32>
    %20 = arith.select %17, %15, %19 : vector<8x64xi1>, vector<8x64xf32>
    %c0_14 = arith.constant 0 : index
    %c0_15 = arith.constant 0 : index
    %21 = vector.load %arg6[%c0_14, %c0_15] : memref<64x128xf32, #tpu.memory_space<vmem>>, vector<64x128xf32>
    %cst_16 = arith.constant dense<0.000000e+00> : vector<8x128xf32>
    %22 = tpu.matmul %20, %21, %cst_16 {dimension_numbers = #tpu.dot_dimension_numbers<[1], [0], [0], [1], [0, 0, 1, 1], [], []>} : vector<8x64xf32>, vector<64x128xf32>, vector<8x128xf32> -> vector<8x128xf32>
    %c0_17 = arith.constant 0 : index
    %c0_18 = arith.constant 0 : index
    %23 = vector.load %arg7[%c0_17, %c0_18] : memref<1x128xf32, #tpu.memory_space<vmem>>, vector<1x128xf32>
    %24 = vector.broadcast %23 : vector<1x128xf32> to vector<8x128xf32>
    %25 = arith.addf %22, %24 : vector<8x128xf32>
    %26 = tpu.iota {dimensions = array<i32: 1>} : vector<8x128xi32>
    %c4_i32 = arith.constant 4 : i32
    %27 = vector.broadcast %c4_i32 : i32 to vector<8x128xi32>
    %28 = arith.cmpi slt, %26, %27 : vector<8x128xi32>
    %29 = math.tanh %25 : vector<8x128xf32>
    %30 = arith.select %28, %25, %29 : vector<8x128xi1>, vector<8x128xf32>
    %c0_19 = arith.constant 0 : index
    %c0_20 = arith.constant 0 : index
    %31 = vector.load %arg8[%c0_19, %c0_20] : memref<8x128xf32, #tpu.memory_space<vmem>>, vector<8x128xf32>
    tpu.vector_store %arg8[%c0_19, %c0_20], %30 {strides = array<i32>} : memref<8x128xf32, #tpu.memory_space<vmem>>, vector<8x128xf32>,
    return
  }
  func.func @transform_0(%arg0: i32) -> (i32, i32) {
    %c0_i32 = arith.constant 0 : i32
    %c0_i32_0 = arith.constant 0 : i32
    return %arg0, %c0_i32 : i32, i32
  }
  func.func @transform_1(%arg0: i32) -> (i32, i32) {
    %c0_i32 = arith.constant 0 : i32
    %c0_i32_0 = arith.constant 0 : i32
    %c0_i32_1 = arith.constant 0 : i32
    return %c0_i32, %c0_i32_0 : i32, i32
  }
  func.func @transform_2(%arg0: i32) -> (i32, i32) {
    %c0_i32 = arith.constant 0 : i32
    %c0_i32_0 = arith.constant 0 : i32
    %c0_i32_1 = arith.constant 0 : i32
    return %c0_i32, %c0_i32_0 : i32, i32
  }
  func.func @transform_3(%arg0: i32) -> (i32, i32) {
    %c0_i32 = arith.constant 0 : i32
    %c0_i32_0 = arith.constant 0 : i32
    %c0_i32_1 = arith.constant 0 : i32
    return %c0_i32, %c0_i32_0 : i32, i32
  }
  func.func @transform_4(%arg0: i32) -> (i32, i32) {
    %c0_i32 = arith.constant 0 : i32
    %c0_i32_0 = arith.constant 0 : i32
    %c0_i32_1 = arith.constant 0 : i32
    return %c0_i32, %c0_i32_0 : i32, i32
  }
  func.func @transform_5(%arg0: i32) -> (i32, i32) {
    %c0_i32 = arith.constant 0 : i32
    %c0_i32_0 = arith.constant 0 : i32
    %c0_i32_1 = arith.constant 0 : i32
    return %c0_i32, %c0_i32_0 : i32, i32
  }
  func.func @transform_6(%arg0: i32) -> (i32, i32) {
    %c0_i32 = arith.constant 0 : i32
    %c0_i32_0 = arith.constant 0 : i32
    %c0_i32_1 = arith.constant 0 : i32
    return %c0_i32, %c0_i32_0 : i32, i32
  }
  func.func @transform_7(%arg0: i32) -> (i32, i32) {
    %c0_i32 = arith.constant 0 : i32
    %c0_i32_0 = arith.constant 0 : i32
    return %arg0, %c0_i32 : i32, i32
  }
}

</mosaic_0001>

<llo_original>
// kernel: actor_forward.1
$region0: #{actor_forward.1}
  #allocation0 [shape = 'u32[]', space=smem, size = 0x4, offset = 0x4, fixed_abs, tag = 'smem constant byte address 0x4 - core index']
  #allocation1 [shape = 'u32[144,128]{1,0:T(1,128)}', space=vmem, size = 0x12000, scoped, tag = 'internal scratch']
  %s0 = inlined_call_operand.vmem [shape: f32[8,32], index: 0, kind: input, shape index: {}]
  %s1 = inlined_call_operand.vmem [shape: f32[32,128], index: 1, kind: input, shape index: {}]
  %s2 = inlined_call_operand.vmem [shape: f32[1,128], index: 2, kind: input, shape index: {}]
  %s3 = inlined_call_operand.vmem [shape: f32[128,64], index: 3, kind: input, shape index: {}]
  %s4 = inlined_call_operand.vmem [shape: f32[1,64], index: 4, kind: input, shape index: {}]
  %s5 = inlined_call_operand.vmem [shape: f32[64,128], index: 5, kind: input, shape index: {}]
  %s6 = inlined_call_operand.vmem [shape: f32[1,128], index: 6, kind: input, shape index: {}]
  %s7 = inlined_call_operand.vmem [shape: f32[8,128], index: 7, kind: output, shape index: {}]
  %s8 = sld [smem:[#allocation0]]
  $region38: #{actor_forward.1} parent=0
    _
  %s10 = ssub.s32 1, %s8
  %s11 = scalar_select 0, %s10, %s8
  // Predicated region
  $region2: #{actor_forward.1} parent=0 // pred_check
    _
  $region3: #{actor_forward.1} parent=0 // pred_check_branch
    %13 = sbr.rel (0) target = $region5
  $region4: #{actor_forward.1} parent=0 // pred_region
    _
  $region5: #{actor_forward.1} parent=0 // pred_fallthru
    _
  // Predicated region
  $region6: #{actor_forward.1} parent=0 // pred_check
    _
  $region7: #{actor_forward.1} parent=0 // pred_check_branch
    %15 = sbr.rel (0) target = $region9
  $region8: #{actor_forward.1} parent=0 // pred_region
    _
  $region9: #{actor_forward.1} parent=0 // pred_fallthru
    _
  // Predicated region
  $region10: #{actor_forward.1} parent=0 // pred_check
    _
  $region11: #{actor_forward.1} parent=0 // pred_check_branch
    %17 = sbr.rel (0) target = $region13
  $region12: #{actor_forward.1} parent=0 // pred_region
    _
  $region13: #{actor_forward.1} parent=0 // pred_fallthru
    _
  // Predicated region
  $region14: #{actor_forward.1} parent=0 // pred_check
    _
  $region15: #{actor_forward.1} parent=0 // pred_check_branch
    %19 = sbr.rel (0) target = $region17
  $region16: #{actor_forward.1} parent=0 // pred_region
    _
  $region17: #{actor_forward.1} parent=0 // pred_fallthru
    _
  // Predicated region
  $region18: #{actor_forward.1} parent=0 // pred_check
    _
  $region19: #{actor_forward.1} parent=0 // pred_check_branch
    %21 = sbr.rel (0) target = $region21
  $region20: #{actor_forward.1} parent=0 // pred_region
    _
  $region21: #{actor_forward.1} parent=0 // pred_fallthru
    _
  // Predicated region
  $region22: #{actor_forward.1} parent=0 // pred_check
    _
  $region23: #{actor_forward.1} parent=0 // pred_check_branch
    %23 = sbr.rel (0) target = $region25
  $region24: #{actor_forward.1} parent=0 // pred_region
    _
  $region25: #{actor_forward.1} parent=0 // pred_fallthru
    _
  // Predicated region
  $region26: #{actor_forward.1} parent=0 // pred_check
    _
  $region27: #{actor_forward.1} parent=0 // pred_check_branch
    %25 = sbr.rel (0) target = $region29
  $region28: #{actor_forward.1} parent=0 // pred_region
    _
  $region29: #{actor_forward.1} parent=0 // pred_fallthru
    _
  %v26 = vld [vmem:[%s0] sm:$0xff]
  %v27 = vld [vmem:[%s1] sm:$0xff]
  %v28 = vld [vmem:[%s1 + $0x8] sm:$0xff]
  %v29 = vld [vmem:[%s1 + $0x10] sm:$0xff]
  %v30 = vld [vmem:[%s1 + $0x18] sm:$0xff]
  %v31 = vld [vmem:[%s2] sm:$0x1]
  %v33 = vlaneseq
  %v34 = vshrl.u32 %v33, 7
  %v35 = vsub.s32 0, %v34
  %v36 = vrot.slane %v31, %v35
  %vm38 = vcmask 261120
  %v40 = vsel %vm38, %v26, 0
  %42 = vmatprep.subr.mxu0 0.0
  %43 = vmatpush1.msra.mxu0 %v27
  %44 = vmatprep.subr.mxu0 0.0
  %45 = vmatpush1.msra.mxu0 %v28
  %46 = vmatprep.subr.mxu0 0.0
  %47 = vmatpush1.msra.mxu0 %v29
  %48 = vmatprep.subr.mxu0 0.0
  %49 = vmatpush1.msra.mxu0 %v30
  %50 = vmatprep.subr.mxu0 0.0
  %51 = vmatpush1.msra.mxu0 0.0
  %52 = vmatprep.subr.mxu0 0.0
  %53 = vmatpush1.msra.mxu0 0.0
  %54 = vmatprep.subr.mxu0 0.0
  %55 = vmatpush1.msra.mxu0 0.0
  %56 = vmatprep.subr.mxu0 0.0
  %57 = vmatpush1.msra.mxu0 0.0
  %58 = vmatprep.subr.mxu0 0.0
  %59 = vmatpush1.msra.mxu0 0.0
  %60 = vmatprep.subr.mxu0 0.0
  %61 = vmatpush1.msra.mxu0 0.0
  %62 = vmatprep.subr.mxu0 0.0
  %63 = vmatpush1.msra.mxu0 0.0
  %64 = vmatprep.subr.mxu0 0.0
  %65 = vmatpush1.msra.mxu0 0.0
  %66 = vmatprep.subr.mxu0 0.0
  %67 = vmatpush1.msra.mxu0 0.0
  %68 = vmatprep.subr.mxu0 0.0
  %69 = vmatpush1.msra.mxu0 0.0
  %70 = vmatprep.subr.mxu0 0.0
  %71 = vmatpush1.msra.mxu0 0.0
  %72 = vmatprep.subr.mxu0 0.0
  %73 = vmatpush1.msra.mxu0 0.0
  %74 = vmatprep.subr.mxu0 0.0
  %75 = vmatpush1.msra.mxu0 0.0
  %76 = vmatprep.subr.mxu0 0.0
  %77 = vmatpush1.msra.mxu0 0.0
  %78 = vmatprep.subr.mxu0 0.0
  %79 = vmatpush1.msra.mxu0 0.0
  %80 = vmatprep.subr.mxu0 0.0
  %81 = vmatpush1.msra.mxu0 0.0
  %82 = vmatprep.subr.mxu0 0.0
  %83 = vmatpush1.msra.mxu0 0.0
  %84 = vmatprep.subr.mxu0 0.0
  %85 = vmatpush1.msra.mxu0 0.0
  %86 = vmatprep.subr.mxu0 0.0
  %87 = vmatpush1.msra.mxu0 0.0
  %88 = vmatprep.subr.mxu0 0.0
  %89 = vmatpush1.msra.mxu0 0.0
  %90 = vmatprep.subr.mxu0 0.0
  %91 = vmatpush1.msra.mxu0 0.0
  %92 = vmatprep.subr.mxu0 0.0
  %93 = vmatpush1.msra.mxu0 0.0
  %94 = vmatprep.subr.mxu0 0.0
  %95 = vmatpush1.msra.mxu0 0.0
  %96 = vmatprep.subr.mxu0 0.0
  %97 = vmatpush1.msra.mxu0 0.0
  %98 = vmatprep.subr.mxu0 0.0
  %99 = vmatpush1.msra.mxu0 0.0
  %100 = vmatprep.subr.mxu0 0.0
  %101 = vmatpush1.msra.mxu0 0.0
  %102 = vmatprep.subr.mxu0 0.0
  %103 = vmatpush1.msra.mxu0 0.0
  %104 = vmatprep.subr.mxu0 0.0
  %105 = vmatpush1.msra.mxu0 0.0
  %106 = vmatprep.mubr.f32.mxu0 0.0
  %107 = vmatmul.mubr.f32.gmra.mrb[0].mxu0 %v40
  %v108 = vpop.f32.mrb[0].mxu0
  %v109 = vadd.f32 %v36, %v108
  %v110 = vpop.f32.mrb[0].mxu0
  %111 = vdwg.mxu0
  %vm112 = vcmp.gt.f32.partialorder %v109, 0.0
  %v113 = vmul.f32 %v109, 0.01
  %v114 = vsel %vm112, %v109, %v113
  %v115 = vld [vmem:[%s3] sm:$0xff]
  %v116 = vld [vmem:[%s3 + $0x8] sm:$0xff]
  %v117 = vld [vmem:[%s3 + $0x10] sm:$0xff]
  %v118 = vld [vmem:[%s3 + $0x18] sm:$0xff]
  %v119 = vld [vmem:[%s3 + $0x20] sm:$0xff]
  %v120 = vld [vmem:[%s3 + $0x28] sm:$0xff]
  %v121 = vld [vmem:[%s3 + $0x30] sm:$0xff]
  %v122 = vld [vmem:[%s3 + $0x38] sm:$0xff]
  %v123 = vld [vmem:[%s3 + $0x40] sm:$0xff]
  %v124 = vld [vmem:[%s3 + $0x48] sm:$0xff]
  %v125 = vld [vmem:[%s3 + $0x50] sm:$0xff]
  %v126 = vld [vmem:[%s3 + $0x58] sm:$0xff]
  %v127 = vld [vmem:[%s3 + $0x60] sm:$0xff]
  %v128 = vld [vmem:[%s3 + $0x68] sm:$0xff]
  %v129 = vld [vmem:[%s3 + $0x70] sm:$0xff]
  %v130 = vld [vmem:[%s3 + $0x78] sm:$0xff]
  %v131 = vld [vmem:[%s4] sm:$0x1]
  %v133 = vlaneseq
  %v134 = vshrl.u32 %v133, 7
  %v135 = vsub.s32 0, %v134
  %v136 = vrot.slane %v131, %v135
  %138 = vmatprep.subr.mxu0 0.0
  %139 = vmatpush1.msra.mxu0 %v115
  %140 = vmatprep.subr.mxu0 0.0
  %141 = vmatpush1.msra.mxu0 %v116
  %142 = vmatprep.subr.mxu0 0.0
  %143 = vmatpush1.msra.mxu0 %v117
  %144 = vmatprep.subr.mxu0 0.0
  %145 = vmatpush1.msra.mxu0 %v118
  %146 = vmatprep.subr.mxu0 0.0
  %147 = vmatpush1.msra.mxu0 %v119
  %148 = vmatprep.subr.mxu0 0.0
  %149 = vmatpush1.msra.mxu0 %v120
  %150 = vmatprep.subr.mxu0 0.0
  %151 = vmatpush1.msra.mxu0 %v121
  %152 = vmatprep.subr.mxu0 0.0
  %153 = vmatpush1.msra.mxu0 %v122
  %154 = vmatprep.subr.mxu0 0.0
  %155 = vmatpush1.msra.mxu0 %v123
  %156 = vmatprep.subr.mxu0 0.0
  %157 = vmatpush1.msra.mxu0 %v124
  %158 = vmatprep.subr.mxu0 0.0
  %159 = vmatpush1.msra.mxu0 %v125
  %160 = vmatprep.subr.mxu0 0.0
  %161 = vmatpush1.msra.mxu0 %v126
  %162 = vmatprep.subr.mxu0 0.0
  %163 = vmatpush1.msra.mxu0 %v127
  %164 = vmatprep.subr.mxu0 0.0
  %165 = vmatpush1.msra.mxu0 %v128
  %166 = vmatprep.subr.mxu0 0.0
  %167 = vmatpush1.msra.mxu0 %v129
  %168 = vmatprep.subr.mxu0 0.0
  %169 = vmatpush1.msra.mxu0 %v130
  %170 = vmatprep.subr.mxu0 0.0
  %171 = vmatpush1.msra.mxu0 0.0
  %172 = vmatprep.subr.mxu0 0.0
  %173 = vmatpush1.msra.mxu0 0.0
  %174 = vmatprep.subr.mxu0 0.0
  %175 = vmatpush1.msra.mxu0 0.0
  %176 = vmatprep.subr.mxu0 0.0
  %177 = vmatpush1.msra.mxu0 0.0
  %178 = vmatprep.subr.mxu0 0.0
  %179 = vmatpush1.msra.mxu0 0.0
  %180 = vmatprep.subr.mxu0 0.0
  %181 = vmatpush1.msra.mxu0 0.0
  %182 = vmatprep.subr.mxu0 0.0
  %183 = vmatpush1.msra.mxu0 0.0
  %184 = vmatprep.subr.mxu0 0.0
  %185 = vmatpush1.msra.mxu0 0.0
  %186 = vmatprep.subr.mxu0 0.0
  %187 = vmatpush1.msra.mxu0 0.0
  %188 = vmatprep.subr.mxu0 0.0
  %189 = vmatpush1.msra.mxu0 0.0
  %190 = vmatprep.subr.mxu0 0.0
  %191 = vmatpush1.msra.mxu0 0.0
  %192 = vmatprep.subr.mxu0 0.0
  %193 = vmatpush1.msra.mxu0 0.0
  %194 = vmatprep.subr.mxu0 0.0
  %195 = vmatpush1.msra.mxu0 0.0
  %196 = vmatprep.subr.mxu0 0.0
  %197 = vmatpush1.msra.mxu0 0.0
  %198 = vmatprep.subr.mxu0 0.0
  %199 = vmatpush1.msra.mxu0 0.0
  %200 = vmatprep.subr.mxu0 0.0
  %201 = vmatpush1.msra.mxu0 0.0
  %202 = vmatprep.mubr.f32.mxu0 0.0
  %203 = vmatmul.mubr.f32.gmra.mrb[0].mxu0 %v114
  %v204 = vpop.f32.mrb[0].mxu0
  %v205 = vadd.f32 %v136, %v204
  %v206 = vpop.f32.mrb[0].mxu0
  %207 = vdwg.mxu0
  %vm208 = vcmp.gt.f32.partialorder %v205, 0.0
  %v209 = vmul.f32 %v205, 0.01
  %v210 = vsel %vm208, %v205, %v209
  %v211 = vld [vmem:[%s5] sm:$0xff]
  %v212 = vld [vmem:[%s5 + $0x8] sm:$0xff]
  %v213 = vld [vmem:[%s5 + $0x10] sm:$0xff]
  %v214 = vld [vmem:[%s5 + $0x18] sm:$0xff]
  %v215 = vld [vmem:[%s5 + $0x20] sm:$0xff]
  %v216 = vld [vmem:[%s5 + $0x28] sm:$0xff]
  %v217 = vld [vmem:[%s5 + $0x30] sm:$0xff]
  %v218 = vld [vmem:[%s5 + $0x38] sm:$0xff]
  %v219 = vld [vmem:[%s6] sm:$0x1]
  %v221 = vlaneseq
  %v222 = vshrl.u32 %v221, 7
  %v223 = vsub.s32 0, %v222
  %v224 = vrot.slane %v219, %v223
  %vm226 = vcmask 523264
  %v228 = vsel %vm226, %v210, 0
  %230 = vmatprep.subr.mxu0 0.0
  %231 = vmatpush1.msra.mxu0 %v211
  %232 = vmatprep.subr.mxu0 0.0
  %233 = vmatpush1.msra.mxu0 %v212
  %234 = vmatprep.subr.mxu0 0.0
  %235 = vmatpush1.msra.mxu0 %v213
  %236 = vmatprep.subr.mxu0 0.0
  %237 = vmatpush1.msra.mxu0 %v214
  %238 = vmatprep.subr.mxu0 0.0
  %239 = vmatpush1.msra.mxu0 %v215
  %240 = vmatprep.subr.mxu0 0.0
  %241 = vmatpush1.msra.mxu0 %v216
  %242 = vmatprep.subr.mxu0 0.0
  %243 = vmatpush1.msra.mxu0 %v217
  %244 = vmatprep.subr.mxu0 0.0
  %245 = vmatpush1.msra.mxu0 %v218
  %246 = vmatprep.subr.mxu0 0.0
  %247 = vmatpush1.msra.mxu0 0.0
  %248 = vmatprep.subr.mxu0 0.0
  %249 = vmatpush1.msra.mxu0 0.0
  %250 = vmatprep.subr.mxu0 0.0
  %251 = vmatpush1.msra.mxu0 0.0
  %252 = vmatprep.subr.mxu0 0.0
  %253 = vmatpush1.msra.mxu0 0.0
  %254 = vmatprep.subr.mxu0 0.0
  %255 = vmatpush1.msra.mxu0 0.0
  %256 = vmatprep.subr.mxu0 0.0
  %257 = vmatpush1.msra.mxu0 0.0
  %258 = vmatprep.subr.mxu0 0.0
  %259 = vmatpush1.msra.mxu0 0.0
  %260 = vmatprep.subr.mxu0 0.0
  %261 = vmatpush1.msra.mxu0 0.0
  %262 = vmatprep.subr.mxu0 0.0
  %263 = vmatpush1.msra.mxu0 0.0
  %264 = vmatprep.subr.mxu0 0.0
  %265 = vmatpush1.msra.mxu0 0.0
  %266 = vmatprep.subr.mxu0 0.0
  %267 = vmatpush1.msra.mxu0 0.0
  %268 = vmatprep.subr.mxu0 0.0
  %269 = vmatpush1.msra.mxu0 0.0
  %270 = vmatprep.subr.mxu0 0.0
  %271 = vmatpush1.msra.mxu0 0.0
  %272 = vmatprep.subr.mxu0 0.0
  %273 = vmatpush1.msra.mxu0 0.0
  %274 = vmatprep.subr.mxu0 0.0
  %275 = vmatpush1.msra.mxu0 0.0
  %276 = vmatprep.subr.mxu0 0.0
  %277 = vmatpush1.msra.mxu0 0.0
  %278 = vmatprep.subr.mxu0 0.0
  %279 = vmatpush1.msra.mxu0 0.0
  %280 = vmatprep.subr.mxu0 0.0
  %281 = vmatpush1.msra.mxu0 0.0
  %282 = vmatprep.subr.mxu0 0.0
  %283 = vmatpush1.msra.mxu0 0.0
  %284 = vmatprep.subr.mxu0 0.0
  %285 = vmatpush1.msra.mxu0 0.0
  %286 = vmatprep.subr.mxu0 0.0
  %287 = vmatpush1.msra.mxu0 0.0
  %288 = vmatprep.subr.mxu0 0.0
  %289 = vmatpush1.msra.mxu0 0.0
  %290 = vmatprep.subr.mxu0 0.0
  %291 = vmatpush1.msra.mxu0 0.0
  %292 = vmatprep.subr.mxu0 0.0
  %293 = vmatpush1.msra.mxu0 0.0
  %294 = vmatprep.mubr.f32.mxu0 0.0
  %295 = vmatmul.mubr.f32.gmra.mrb[0].mxu0 %v228
  %v296 = vpop.f32.mrb[0].mxu0
  %v297 = vadd.f32 %v224, %v296
  %v298 = vpop.f32.mrb[0].mxu0
  %299 = vdwg.mxu0
  %v300 = vlaneseq
  %v301 = vand.u32 %v300, 127
  %vm302 = vcmp.lt.s32.totalorder %v301, 4
  %v303 = vtanh.pop %v297
  %v304 = vsel %vm302, %v297, %v303
  %305 = vst [vmem:[%s7] sm:$0xff] %v304
  // Predicated region
  $region30: #{actor_forward.1} parent=0 // pred_check
    _
  $region31: #{actor_forward.1} parent=0 // pred_check_branch
    %307 = sbr.rel (0) target = $region33
  $region32: #{actor_forward.1} parent=0 // pred_region
    _
  $region33: #{actor_forward.1} parent=0 // pred_fallthru
    _
  // Predicated region
  $region34: #{actor_forward.1} parent=0 // pred_check
    _
  $region35: #{actor_forward.1} parent=0 // pred_check_branch
    %309 = sbr.rel (0) target = $region37
  $region36: #{actor_forward.1} parent=0 // pred_region
    _
  $region37: #{actor_forward.1} parent=0 // pred_fallthru
    _

</llo_original>
